<compile_context>
chip_gen: v6e
topology: v6e:2x2x1
jax: 0.10.0
libtpu: 0.0.40
codegen_flags: <defaults>
</compile_context>

<pallas_src>
import functools

import jax
import jax.numpy as jnp
from jax.experimental import pallas as pl
from jax.experimental.pallas import tpu as pltpu


# ---------------------------------------------------------------------------
# Kernel
# ---------------------------------------------------------------------------
def _coupling_t(x1, x2, p_refs, s_dim):
    """One AffineCouplingLayer in transposed [feature, batch] layout.

    x1: [dd, TB]      features driving the MLP (passed through unchanged)
    x2: [DD-dd, TB]   features that get affinely transformed
    Returns (trans_x, x1) -- no concatenation; the caller wires the halves.
    """
    w1t, b1t, w2t, b2t, w3st, b3s, w3tt, b3t = [r[...] for r in p_refs]
    # MLP: Linear -> ReLU -> Linear -> ReLU -> Linear (split into s / t heads)
    h = jnp.dot(w1t, x1, preferred_element_type=jnp.float32) + b1t
    h = jnp.maximum(h, 0.0)
    h = jnp.dot(w2t, h, preferred_element_type=jnp.float32) + b2t
    h = jnp.maximum(h, 0.0)
    s = 0.1 * jnp.tanh(jnp.dot(w3st, h, preferred_element_type=jnp.float32) + b3s)
    t = jnp.dot(w3tt, h, preferred_element_type=jnp.float32) + b3t
    # append -sum(s) row so that mean over features is exactly 0
    s_full = jnp.concatenate([s, -jnp.sum(s, axis=0, keepdims=True)], axis=0)
    trans = x2 * jnp.exp(s_full) + t
    return trans, x1


def _block_kernel(x_ref, *refs, dd, s_dim):
    p1 = refs[0:8]
    p2 = refs[8:16]
    out_ref = refs[16]

    x = x_ref[...]                      # [DD, TB], batch on lanes
    x1 = x[:dd, :]
    x2 = x[dd:, :]

    trans1, keep1 = _coupling_t(x1, x2, p1, s_dim)
    # dd == DD - dd: layer 2's driving half is trans1, its transformed half is
    # the original x1 (keep1).  No concat / re-slice round trip.
    trans2, keep2 = _coupling_t(trans1, keep1, p2, s_dim)

    # Output features = [trans2, trans1]; write the two halves directly.
    out_ref[:dd, :] = trans2
    out_ref[dd:, :] = keep2             # keep2 == trans1


# ---------------------------------------------------------------------------
# Wrapper
# ---------------------------------------------------------------------------
def _round_up(n, m):
    return (n + m - 1) // m * m


def _prep_layer(params, s_dim):
    """Transpose weights and split w3/b3 into s- and t-heads (wrapper-side)."""
    w1, b1, w2, b2, w3, b3 = params
    b3 = b3.reshape(-1)
    return (
        w1.T, b1.reshape(-1, 1),              # [H, dd],      [H, 1]
        w2.T, b2.reshape(-1, 1),              # [H, H],       [H, 1]
        w3[:, :s_dim].T, b3[:s_dim].reshape(-1, 1),   # [s_dim, H],  [s_dim, 1]
        w3[:, s_dim:].T, b3[s_dim:].reshape(-1, 1),   # [DD-dd, H],  [DD-dd, 1]
    )


def affine_coupling_block(x, params1, params2, dd, *, batch_tile=512):
    """params{1,2} = (w1, b1, w2, b2, w3, b3) for each coupling layer."""
    B, DD = x.shape
    assert 2 * dd == DD, "optimized kernel assumes dd == DD // 2 (module default)"
    # TODO(synk): dd != DD//2 would need a feature re-split (concat) between layers.
    s_dim = DD - dd - 1

    # Batch tile: multiple of 128 (lane-dense), up to `batch_tile` (>=256 on v6e/v7x).
    tb = min(batch_tile, _round_up(B, 128))
    b_pad = _round_up(B, tb)

    # Transposed, lane-dense layout: batch on lanes, features on sublanes.
    x_t = jnp.pad(x.astype(jnp.float32).T, ((0, 0), (0, b_pad - B)))

    weights = _prep_layer(params1, s_dim) + _prep_layer(params2, s_dim)

    def const_spec(a):
        # Full array, same block every grid step -> stays VMEM-resident.
        return pl.BlockSpec(a.shape, lambda i: (0,) * a.ndim)

    kernel = functools.partial(_block_kernel, dd=dd, s_dim=s_dim)
    out_t = pl.pallas_call(
        kernel,
        out_shape=jax.ShapeDtypeStruct((DD, b_pad), jnp.float32),
        grid=(b_pad // tb,),
        in_specs=[pl.BlockSpec((DD, tb), lambda i: (0, i))]
        + [const_spec(w) for w in weights],
        out_specs=pl.BlockSpec((DD, tb), lambda i: (0, i)),
        compiler_params=pltpu.CompilerParams(
            dimension_semantics=("parallel",),   # 2-TC sharding on v7x; no-op on v5e/v6e
        ),
    )(x_t, *weights)

    return out_t[:, :B].T


# ---------------------------------------------------------------------------
# Deterministic parameter construction (synthetic init, no checkpoint)
# ---------------------------------------------------------------------------
def make_layer_params(key, dd, hidden, out_dim, scale=0.3):
    ks = jax.random.split(key, 6)
    w1 = jax.random.normal(ks[0], (dd, hidden), jnp.float32) * scale
    b1 = jax.random.normal(ks[1], (1, hidden), jnp.float32) * scale
    w2 = jax.random.normal(ks[2], (hidden, hidden), jnp.float32) * scale
    b2 = jax.random.normal(ks[3], (1, hidden), jnp.float32) * scale
    w3 = jax.random.normal(ks[4], (hidden, out_dim), jnp.float32) * scale
    b3 = jax.random.normal(ks[5], (1, out_dim), jnp.float32) * scale
    return (w1, b1, w2, b2, w3, b3)


# ---------------------------------------------------------------------------
# Pure-JAX reference (mirrors the PyTorch forward exactly)
# ---------------------------------------------------------------------------
def _coupling_ref(x, params, dd, s_dim):
    w1, b1, w2, b2, w3, b3 = params
    x1, x2 = x[:, :dd], x[:, dd:]
    h = jnp.maximum(x1 @ w1 + b1, 0.0)
    h = jnp.maximum(h @ w2 + b2, 0.0)
    st = h @ w3 + b3
    s = 0.1 * jnp.tanh(st[:, :s_dim])
    t = st[:, s_dim:]
    s_full = jnp.concatenate([s, -jnp.sum(s, axis=-1, keepdims=True)], axis=-1)
    return jnp.concatenate([x2 * jnp.exp(s_full) + t, x1], axis=-1)


def block_ref(x, params1, params2, dd):
    s_dim = x.shape[1] - dd - 1
    return _coupling_ref(_coupling_ref(x, params1, dd, s_dim), params2, dd, s_dim)


# ---------------------------------------------------------------------------
if __name__ == "__main__":
    # Module hyper-params (small, consistent with AffineCouplingBlock(DD=8)).
    DD = 8
    dd = DD // 2                                # 4
    min_gen_nodes = 30
    hidden = max(min_gen_nodes, DD // 4)        # 30
    out_dim = 2 * (DD - dd) - 1                 # 7
    B = 8

    key = jax.random.PRNGKey(0)
    kx, k1, k2 = jax.random.split(key, 3)
    x = jax.random.normal(kx, (B, DD), jnp.float32)
    params1 = make_layer_params(k1, dd, hidden, out_dim)
    params2 = make_layer_params(k2, dd, hidden, out_dim)

    out = affine_coupling_block(x, params1, params2, dd)
    out = jax.block_until_ready(out)

    ref = block_ref(x, params1, params2, dd)
    assert out.shape == (B, DD)
    assert jnp.allclose(out, ref, rtol=1e-4, atol=1e-4), jnp.max(jnp.abs(out - ref))

    print("KERNEL_OK")
</pallas_src>

<mosaic_0001>
module attributes {stable_mosaic.version = 11 : i64} {
  func.func @_block_kernel(%arg0: i32, %arg1: memref<8x128xf32, #tpu.memory_space<vmem>>, %arg2: memref<30x4xf32, #tpu.memory_space<vmem>>, %arg3: memref<30x1xf32, #tpu.memory_space<vmem>>, %arg4: memref<30x30xf32, #tpu.memory_space<vmem>>, %arg5: memref<30x1xf32, #tpu.memory_space<vmem>>, %arg6: memref<3x30xf32, #tpu.memory_space<vmem>>, %arg7: memref<3x1xf32, #tpu.memory_space<vmem>>, %arg8: memref<4x30xf32, #tpu.memory_space<vmem>>, %arg9: memref<4x1xf32, #tpu.memory_space<vmem>>, %arg10: memref<30x4xf32, #tpu.memory_space<vmem>>, %arg11: memref<30x1xf32, #tpu.memory_space<vmem>>, %arg12: memref<30x30xf32, #tpu.memory_space<vmem>>, %arg13: memref<30x1xf32, #tpu.memory_space<vmem>>, %arg14: memref<3x30xf32, #tpu.memory_space<vmem>>, %arg15: memref<3x1xf32, #tpu.memory_space<vmem>>, %arg16: memref<4x30xf32, #tpu.memory_space<vmem>>, %arg17: memref<4x1xf32, #tpu.memory_space<vmem>>, %arg18: memref<8x128xf32, #tpu.memory_space<vmem>>) attributes {dimension_semantics = [#tpu.dimension_semantics<parallel>], iteration_bounds = array<i64: 1>, scalar_prefetch = 0 : i64, scratch_operands = 0 : i64, tpu.core_type = #tpu.core_type<tc>, window_params = [{transform_indices = @transform_0, window_bounds = array<i64: 8, 128>}, {pipeline_mode = #tpu.pipeline_mode<synchronous>, transform_indices = @transform_1, window_bounds = array<i64: 30, 4>}, {pipeline_mode = #tpu.pipeline_mode<synchronous>, transform_indices = @transform_2, window_bounds = array<i64: 30, 1>}, {pipeline_mode = #tpu.pipeline_mode<synchronous>, transform_indices = @transform_3, window_bounds = array<i64: 30, 30>}, {pipeline_mode = #tpu.pipeline_mode<synchronous>, transform_indices = @transform_4, window_bounds = array<i64: 30, 1>}, {pipeline_mode = #tpu.pipeline_mode<synchronous>, transform_indices = @transform_5, window_bounds = array<i64: 3, 30>}, {pipeline_mode = #tpu.pipeline_mode<synchronous>, transform_indices = @transform_6, window_bounds = array<i64: 3, 1>}, {pipeline_mode = #tpu.pipeline_mode<synchronous>, transform_indices = @transform_7, window_bounds = array<i64: 4, 30>}, {pipeline_mode = #tpu.pipeline_mode<synchronous>, transform_indices = @transform_8, window_bounds = array<i64: 4, 1>}, {pipeline_mode = #tpu.pipeline_mode<synchronous>, transform_indices = @transform_9, window_bounds = array<i64: 30, 4>}, {pipeline_mode = #tpu.pipeline_mode<synchronous>, transform_indices = @transform_10, window_bounds = array<i64: 30, 1>}, {pipeline_mode = #tpu.pipeline_mode<synchronous>, transform_indices = @transform_11, window_bounds = array<i64: 30, 30>}, {pipeline_mode = #tpu.pipeline_mode<synchronous>, transform_indices = @transform_12, window_bounds = array<i64: 30, 1>}, {pipeline_mode = #tpu.pipeline_mode<synchronous>, transform_indices = @transform_13, window_bounds = array<i64: 3, 30>}, {pipeline_mode = #tpu.pipeline_mode<synchronous>, transform_indices = @transform_14, window_bounds = array<i64: 3, 1>}, {pipeline_mode = #tpu.pipeline_mode<synchronous>, transform_indices = @transform_15, window_bounds = array<i64: 4, 30>}, {pipeline_mode = #tpu.pipeline_mode<synchronous>, transform_indices = @transform_16, window_bounds = array<i64: 4, 1>}, {transform_indices = @transform_17, window_bounds = array<i64: 8, 128>}]} {
    %c0 = arith.constant 0 : index
    %c0_0 = arith.constant 0 : index
    %0 = vector.load %arg1[%c0, %c0_0] : memref<8x128xf32, #tpu.memory_space<vmem>>, vector<8x128xf32>
    %1 = vector.extract_strided_slice %0 {offsets = [0, 0], sizes = [4, 128], strides = [1, 1]} : vector<8x128xf32> to vector<4x128xf32>
    %2 = vector.extract_strided_slice %0 {offsets = [4, 0], sizes = [4, 128], strides = [1, 1]} : vector<8x128xf32> to vector<4x128xf32>
    %c0_1 = arith.constant 0 : index
    %c0_2 = arith.constant 0 : index
    %3 = vector.load %arg2[%c0_1, %c0_2] : memref<30x4xf32, #tpu.memory_space<vmem>>, vector<30x4xf32>
    %c0_3 = arith.constant 0 : index
    %c0_4 = arith.constant 0 : index
    %4 = vector.load %arg3[%c0_3, %c0_4] : memref<30x1xf32, #tpu.memory_space<vmem>>, vector<30x1xf32>
    %c0_5 = arith.constant 0 : index
    %c0_6 = arith.constant 0 : index
    %5 = vector.load %arg4[%c0_5, %c0_6] : memref<30x30xf32, #tpu.memory_space<vmem>>, vector<30x30xf32>
    %c0_7 = arith.constant 0 : index
    %c0_8 = arith.constant 0 : index
    %6 = vector.load %arg5[%c0_7, %c0_8] : memref<30x1xf32, #tpu.memory_space<vmem>>, vector<30x1xf32>
    %c0_9 = arith.constant 0 : index
    %c0_10 = arith.constant 0 : index
    %7 = vector.load %arg6[%c0_9, %c0_10] : memref<3x30xf32, #tpu.memory_space<vmem>>, vector<3x30xf32>
    %c0_11 = arith.constant 0 : index
    %c0_12 = arith.constant 0 : index
    %8 = vector.load %arg7[%c0_11, %c0_12] : memref<3x1xf32, #tpu.memory_space<vmem>>, vector<3x1xf32>
    %c0_13 = arith.constant 0 : index
    %c0_14 = arith.constant 0 : index
    %9 = vector.load %arg8[%c0_13, %c0_14] : memref<4x30xf32, #tpu.memory_space<vmem>>, vector<4x30xf32>
    %c0_15 = arith.constant 0 : index
    %c0_16 = arith.constant 0 : index
    %10 = vector.load %arg9[%c0_15, %c0_16] : memref<4x1xf32, #tpu.memory_space<vmem>>, vector<4x1xf32>
    %cst = arith.constant dense<0.000000e+00> : vector<30x128xf32>
    %11 = tpu.matmul %3, %1, %cst {dimension_numbers = #tpu.dot_dimension_numbers<[1], [0], [0], [1], [0, 0, 1, 1], [], []>} : vector<30x4xf32>, vector<4x128xf32>, vector<30x128xf32> -> vector<30x128xf32>
    %12 = vector.broadcast %4 : vector<30x1xf32> to vector<30x128xf32>
    %13 = arith.addf %11, %12 : vector<30x128xf32>
    %cst_17 = arith.constant 0.000000e+00 : f32
    %14 = vector.broadcast %cst_17 : f32 to vector<30x128xf32>
    %15 = arith.maximumf %13, %14 : vector<30x128xf32>
    %cst_18 = arith.constant dense<0.000000e+00> : vector<30x128xf32>
    %16 = tpu.matmul %5, %15, %cst_18 {dimension_numbers = #tpu.dot_dimension_numbers<[1], [0], [0], [1], [0, 0, 1, 1], [], []>} : vector<30x30xf32>, vector<30x128xf32>, vector<30x128xf32> -> vector<30x128xf32>
    %17 = vector.broadcast %6 : vector<30x1xf32> to vector<30x128xf32>
    %18 = arith.addf %16, %17 : vector<30x128xf32>
    %cst_19 = arith.constant 0.000000e+00 : f32
    %19 = vector.broadcast %cst_19 : f32 to vector<30x128xf32>
    %20 = arith.maximumf %18, %19 : vector<30x128xf32>
    %cst_20 = arith.constant dense<0.000000e+00> : vector<3x128xf32>
    %21 = tpu.matmul %7, %20, %cst_20 {dimension_numbers = #tpu.dot_dimension_numbers<[1], [0], [0], [1], [0, 0, 1, 1], [], []>} : vector<3x30xf32>, vector<30x128xf32>, vector<3x128xf32> -> vector<3x128xf32>
    %22 = vector.broadcast %8 : vector<3x1xf32> to vector<3x128xf32>
    %23 = arith.addf %21, %22 : vector<3x128xf32>
    %24 = math.tanh %23 : vector<3x128xf32>
    %cst_21 = arith.constant 1.000000e-01 : f32
    %25 = vector.broadcast %cst_21 : f32 to vector<3x128xf32>
    %26 = arith.mulf %25, %24 : vector<3x128xf32>
    %cst_22 = arith.constant dense<0.000000e+00> : vector<4x128xf32>
    %27 = tpu.matmul %9, %20, %cst_22 {dimension_numbers = #tpu.dot_dimension_numbers<[1], [0], [0], [1], [0, 0, 1, 1], [], []>} : vector<4x30xf32>, vector<30x128xf32>, vector<4x128xf32> -> vector<4x128xf32>
    %28 = vector.broadcast %10 : vector<4x1xf32> to vector<4x128xf32>
    %29 = arith.addf %27, %28 : vector<4x128xf32>
    %cst_23 = arith.constant dense<0.000000e+00> : vector<128xf32>
    %30 = vector.multi_reduction <add>, %26, %cst_23 [0] : vector<3x128xf32> to vector<128xf32>
    %31 = vector.shape_cast %30 : vector<128xf32> to vector<1x128xf32>
    %cst_24 = arith.constant 0.000000e+00 : f32
    %32 = vector.broadcast %cst_24 : f32 to vector<1x128xf32>
    %33 = arith.subf %32, %31 : vector<1x128xf32>
    %34 = tpu.concatenate %26, %33 in 0 : vector<3x128xf32>, vector<1x128xf32> -> vector<4x128xf32>
    %35 = math.exp %34 : vector<4x128xf32>
    %36 = arith.mulf %2, %35 : vector<4x128xf32>
    %37 = arith.addf %36, %29 : vector<4x128xf32>
    %c0_25 = arith.constant 0 : index
    %c0_26 = arith.constant 0 : index
    %38 = vector.load %arg10[%c0_25, %c0_26] : memref<30x4xf32, #tpu.memory_space<vmem>>, vector<30x4xf32>
    %c0_27 = arith.constant 0 : index
    %c0_28 = arith.constant 0 : index
    %39 = vector.load %arg11[%c0_27, %c0_28] : memref<30x1xf32, #tpu.memory_space<vmem>>, vector<30x1xf32>
    %c0_29 = arith.constant 0 : index
    %c0_30 = arith.constant 0 : index
    %40 = vector.load %arg12[%c0_29, %c0_30] : memref<30x30xf32, #tpu.memory_space<vmem>>, vector<30x30xf32>
    %c0_31 = arith.constant 0 : index
    %c0_32 = arith.constant 0 : index
    %41 = vector.load %arg13[%c0_31, %c0_32] : memref<30x1xf32, #tpu.memory_space<vmem>>, vector<30x1xf32>
    %c0_33 = arith.constant 0 : index
    %c0_34 = arith.constant 0 : index
    %42 = vector.load %arg14[%c0_33, %c0_34] : memref<3x30xf32, #tpu.memory_space<vmem>>, vector<3x30xf32>
    %c0_35 = arith.constant 0 : index
    %c0_36 = arith.constant 0 : index
    %43 = vector.load %arg15[%c0_35, %c0_36] : memref<3x1xf32, #tpu.memory_space<vmem>>, vector<3x1xf32>
    %c0_37 = arith.constant 0 : index
    %c0_38 = arith.constant 0 : index
    %44 = vector.load %arg16[%c0_37, %c0_38] : memref<4x30xf32, #tpu.memory_space<vmem>>, vector<4x30xf32>
    %c0_39 = arith.constant 0 : index
    %c0_40 = arith.constant 0 : index
    %45 = vector.load %arg17[%c0_39, %c0_40] : memref<4x1xf32, #tpu.memory_space<vmem>>, vector<4x1xf32>
    %cst_41 = arith.constant dense<0.000000e+00> : vector<30x128xf32>
    %46 = tpu.matmul %38, %37, %cst_41 {dimension_numbers = #tpu.dot_dimension_numbers<[1], [0], [0], [1], [0, 0, 1, 1], [], []>} : vector<30x4xf32>, vector<4x128xf32>, vector<30x128xf32> -> vector<30x128xf32>
    %47 = vector.broadcast %39 : vector<30x1xf32> to vector<30x128xf32>
    %48 = arith.addf %46, %47 : vector<30x128xf32>
    %cst_42 = arith.constant 0.000000e+00 : f32
    %49 = vector.broadcast %cst_42 : f32 to vector<30x128xf32>
    %50 = arith.maximumf %48, %49 : vector<30x128xf32>
    %cst_43 = arith.constant dense<0.000000e+00> : vector<30x128xf32>
    %51 = tpu.matmul %40, %50, %cst_43 {dimension_numbers = #tpu.dot_dimension_numbers<[1], [0], [0], [1], [0, 0, 1, 1], [], []>} : vector<30x30xf32>, vector<30x128xf32>, vector<30x128xf32> -> vector<30x128xf32>
    %52 = vector.broadcast %41 : vector<30x1xf32> to vector<30x128xf32>
    %53 = arith.addf %51, %52 : vector<30x128xf32>
    %cst_44 = arith.constant 0.000000e+00 : f32
    %54 = vector.broadcast %cst_44 : f32 to vector<30x128xf32>
    %55 = arith.maximumf %53, %54 : vector<30x128xf32>
    %cst_45 = arith.constant dense<0.000000e+00> : vector<3x128xf32>
    %56 = tpu.matmul %42, %55, %cst_45 {dimension_numbers = #tpu.dot_dimension_numbers<[1], [0], [0], [1], [0, 0, 1, 1], [], []>} : vector<3x30xf32>, vector<30x128xf32>, vector<3x128xf32> -> vector<3x128xf32>
    %57 = vector.broadcast %43 : vector<3x1xf32> to vector<3x128xf32>
    %58 = arith.addf %56, %57 : vector<3x128xf32>
    %59 = math.tanh %58 : vector<3x128xf32>
    %cst_46 = arith.constant 1.000000e-01 : f32
    %60 = vector.broadcast %cst_46 : f32 to vector<3x128xf32>
    %61 = arith.mulf %60, %59 : vector<3x128xf32>
    %cst_47 = arith.constant dense<0.000000e+00> : vector<4x128xf32>
    %62 = tpu.matmul %44, %55, %cst_47 {dimension_numbers = #tpu.dot_dimension_numbers<[1], [0], [0], [1], [0, 0, 1, 1], [], []>} : vector<4x30xf32>, vector<30x128xf32>, vector<4x128xf32> -> vector<4x128xf32>
    %63 = vector.broadcast %45 : vector<4x1xf32> to vector<4x128xf32>
    %64 = arith.addf %62, %63 : vector<4x128xf32>
    %cst_48 = arith.constant dense<0.000000e+00> : vector<128xf32>
    %65 = vector.multi_reduction <add>, %61, %cst_48 [0] : vector<3x128xf32> to vector<128xf32>
    %66 = vector.shape_cast %65 : vector<128xf32> to vector<1x128xf32>
    %cst_49 = arith.constant 0.000000e+00 : f32
    %67 = vector.broadcast %cst_49 : f32 to vector<1x128xf32>
    %68 = arith.subf %67, %66 : vector<1x128xf32>
    %69 = tpu.concatenate %61, %68 in 0 : vector<3x128xf32>, vector<1x128xf32> -> vector<4x128xf32>
    %70 = math.exp %69 : vector<4x128xf32>
    %71 = arith.mulf %1, %70 : vector<4x128xf32>
    %72 = arith.addf %71, %64 : vector<4x128xf32>
    %c0_50 = arith.constant 0 : index
    %c0_51 = arith.constant 0 : index
    %73 = vector.load %arg18[%c0_50, %c0_51] : memref<8x128xf32, #tpu.memory_space<vmem>>, vector<4x128xf32>
    tpu.vector_store %arg18[%c0_50, %c0_51], %72 {strides = array<i32>} : memref<8x128xf32, #tpu.memory_space<vmem>>, vector<4x128xf32>,
    %c4 = arith.constant 4 : index
    %c0_52 = arith.constant 0 : index
    %74 = vector.load %arg18[%c4, %c0_52] : memref<8x128xf32, #tpu.memory_space<vmem>>, vector<4x128xf32>
    tpu.vector_store %arg18[%c4, %c0_52], %37 {strides = array<i32>} : memref<8x128xf32, #tpu.memory_space<vmem>>, vector<4x128xf32>,
    return
  }
  func.func @transform_0(%arg0: i32) -> (i32, i32) {
    %c0_i32 = arith.constant 0 : i32
    %c0_i32_0 = arith.constant 0 : i32
    return %c0_i32, %arg0 : i32, i32
  }
  func.func @transform_1(%arg0: i32) -> (i32, i32) {
    %c0_i32 = arith.constant 0 : i32
    %c0_i32_0 = arith.constant 0 : i32
    %c0_i32_1 = arith.constant 0 : i32
    return %c0_i32, %c0_i32_0 : i32, i32
  }
  func.func @transform_2(%arg0: i32) -> (i32, i32) {
    %c0_i32 = arith.constant 0 : i32
    %c0_i32_0 = arith.constant 0 : i32
    %c0_i32_1 = arith.constant 0 : i32
    return %c0_i32, %c0_i32_0 : i32, i32
  }
  func.func @transform_3(%arg0: i32) -> (i32, i32) {
    %c0_i32 = arith.constant 0 : i32
    %c0_i32_0 = arith.constant 0 : i32
    %c0_i32_1 = arith.constant 0 : i32
    return %c0_i32, %c0_i32_0 : i32, i32
  }
  func.func @transform_4(%arg0: i32) -> (i32, i32) {
    %c0_i32 = arith.constant 0 : i32
    %c0_i32_0 = arith.constant 0 : i32
    %c0_i32_1 = arith.constant 0 : i32
    return %c0_i32, %c0_i32_0 : i32, i32
  }
  func.func @transform_5(%arg0: i32) -> (i32, i32) {
    %c0_i32 = arith.constant 0 : i32
    %c0_i32_0 = arith.constant 0 : i32
    %c0_i32_1 = arith.constant 0 : i32
    return %c0_i32, %c0_i32_0 : i32, i32
  }
  func.func @transform_6(%arg0: i32) -> (i32, i32) {
    %c0_i32 = arith.constant 0 : i32
    %c0_i32_0 = arith.constant 0 : i32
    %c0_i32_1 = arith.constant 0 : i32
    return %c0_i32, %c0_i32_0 : i32, i32
  }
  func.func @transform_7(%arg0: i32) -> (i32, i32) {
    %c0_i32 = arith.constant 0 : i32
    %c0_i32_0 = arith.constant 0 : i32
    %c0_i32_1 = arith.constant 0 : i32
    return %c0_i32, %c0_i32_0 : i32, i32
  }
  func.func @transform_8(%arg0: i32) -> (i32, i32) {
    %c0_i32 = arith.constant 0 : i32
    %c0_i32_0 = arith.constant 0 : i32
    %c0_i32_1 = arith.constant 0 : i32
    return %c0_i32, %c0_i32_0 : i32, i32
  }
  func.func @transform_9(%arg0: i32) -> (i32, i32) {
    %c0_i32 = arith.constant 0 : i32
    %c0_i32_0 = arith.constant 0 : i32
    %c0_i32_1 = arith.constant 0 : i32
    return %c0_i32, %c0_i32_0 : i32, i32
  }
  func.func @transform_10(%arg0: i32) -> (i32, i32) {
    %c0_i32 = arith.constant 0 : i32
    %c0_i32_0 = arith.constant 0 : i32
    %c0_i32_1 = arith.constant 0 : i32
    return %c0_i32, %c0_i32_0 : i32, i32
  }
  func.func @transform_11(%arg0: i32) -> (i32, i32) {
    %c0_i32 = arith.constant 0 : i32
    %c0_i32_0 = arith.constant 0 : i32
    %c0_i32_1 = arith.constant 0 : i32
    return %c0_i32, %c0_i32_0 : i32, i32
  }
  func.func @transform_12(%arg0: i32) -> (i32, i32) {
    %c0_i32 = arith.constant 0 : i32
    %c0_i32_0 = arith.constant 0 : i32
    %c0_i32_1 = arith.constant 0 : i32
    return %c0_i32, %c0_i32_0 : i32, i32
  }
  func.func @transform_13(%arg0: i32) -> (i32, i32) {
    %c0_i32 = arith.constant 0 : i32
    %c0_i32_0 = arith.constant 0 : i32
    %c0_i32_1 = arith.constant 0 : i32
    return %c0_i32, %c0_i32_0 : i32, i32
  }
  func.func @transform_14(%arg0: i32) -> (i32, i32) {
    %c0_i32 = arith.constant 0 : i32
    %c0_i32_0 = arith.constant 0 : i32
    %c0_i32_1 = arith.constant 0 : i32
    return %c0_i32, %c0_i32_0 : i32, i32
  }
  func.func @transform_15(%arg0: i32) -> (i32, i32) {
    %c0_i32 = arith.constant 0 : i32
    %c0_i32_0 = arith.constant 0 : i32
    %c0_i32_1 = arith.constant 0 : i32
    return %c0_i32, %c0_i32_0 : i32, i32
  }
  func.func @transform_16(%arg0: i32) -> (i32, i32) {
    %c0_i32 = arith.constant 0 : i32
    %c0_i32_0 = arith.constant 0 : i32
    %c0_i32_1 = arith.constant 0 : i32
    return %c0_i32, %c0_i32_0 : i32, i32
  }
  func.func @transform_17(%arg0: i32) -> (i32, i32) {
    %c0_i32 = arith.constant 0 : i32
    %c0_i32_0 = arith.constant 0 : i32
    return %c0_i32, %arg0 : i32, i32
  }
}

</mosaic_0001>

<llo_original>
// kernel: tpu_custom_call.1
$region0: #{tpu_custom_call.1}
  #allocation0 [shape = 'u32[]', space=smem, size = 0x4, offset = 0x4, fixed_abs, tag = 'smem constant byte address 0x4 - core index']
  #allocation1 [shape = 'u32[144,128]{1,0:T(1,128)}', space=vmem, size = 0x12000, scoped, tag = 'internal scratch']
  %s0 = inlined_call_operand.vmem [shape: f32[8,128], index: 0, kind: input, shape index: {}]
  %s1 = inlined_call_operand.vmem [shape: f32[30,4], index: 1, kind: input, shape index: {}]
  %s2 = inlined_call_operand.vmem [shape: f32[30,1], index: 2, kind: input, shape index: {}]
  %s3 = inlined_call_operand.vmem [shape: f32[30,30], index: 3, kind: input, shape index: {}]
  %s4 = inlined_call_operand.vmem [shape: f32[30,1], index: 4, kind: input, shape index: {}]
  %s5 = inlined_call_operand.vmem [shape: f32[3,30], index: 5, kind: input, shape index: {}]
  %s6 = inlined_call_operand.vmem [shape: f32[3,1], index: 6, kind: input, shape index: {}]
  %s7 = inlined_call_operand.vmem [shape: f32[4,30], index: 7, kind: input, shape index: {}]
  %s8 = inlined_call_operand.vmem [shape: f32[4,1], index: 8, kind: input, shape index: {}]
  %s9 = inlined_call_operand.vmem [shape: f32[30,4], index: 9, kind: input, shape index: {}]
  %s10 = inlined_call_operand.vmem [shape: f32[30,1], index: 10, kind: input, shape index: {}]
  %s11 = inlined_call_operand.vmem [shape: f32[30,30], index: 11, kind: input, shape index: {}]
  %s12 = inlined_call_operand.vmem [shape: f32[30,1], index: 12, kind: input, shape index: {}]
  %s13 = inlined_call_operand.vmem [shape: f32[3,30], index: 13, kind: input, shape index: {}]
  %s14 = inlined_call_operand.vmem [shape: f32[3,1], index: 14, kind: input, shape index: {}]
  %s15 = inlined_call_operand.vmem [shape: f32[4,30], index: 15, kind: input, shape index: {}]
  %s16 = inlined_call_operand.vmem [shape: f32[4,1], index: 16, kind: input, shape index: {}]
  %s17 = inlined_call_operand.hbm [shape: f32[8,128], index: 17, kind: output, shape index: {}]
  %s18 = sld [smem:[#allocation0]]
  $region78: #{tpu_custom_call.1} parent=0
    _
  %s20 = ssub.s32 1, %s18
  %s21 = scalar_select 0, %s20, %s18
  $region1: #{tpu_custom_call.1} parent=0
    #allocation2 [shape = 'u8[4096]{0}', space=vmem, size = 0x1000, scoped, tag = 'output window, operand 0, single buffered']
    #allocation3 [shape = 's32[1]{0}', space=sflag, size = 0x4, scoped, tag = 'scoped memory for tpu_custom_call.1']
    %22 = vsyncpa [#allocation3], 0
    // Predicated region
    $region2: #{tpu_custom_call.1} parent=1 // pred_check
      _
    $region3: #{tpu_custom_call.1} parent=1 // pred_check_branch
      %24 = sbr.rel (0) target = $region5
    $region4: #{tpu_custom_call.1} parent=1 // pred_region
      _
    $region5: #{tpu_custom_call.1} parent=1 // pred_fallthru
      _
    // Predicated region
    $region6: #{tpu_custom_call.1} parent=1 // pred_check
      _
    $region7: #{tpu_custom_call.1} parent=1 // pred_check_branch
      %26 = sbr.rel (0) target = $region9
    $region8: #{tpu_custom_call.1} parent=1 // pred_region
      _
    $region9: #{tpu_custom_call.1} parent=1 // pred_fallthru
      _
    // Predicated region
    $region10: #{tpu_custom_call.1} parent=1 // pred_check
      _
    $region11: #{tpu_custom_call.1} parent=1 // pred_check_branch
      %28 = sbr.rel (0) target = $region13
    $region12: #{tpu_custom_call.1} parent=1 // pred_region
      _
    $region13: #{tpu_custom_call.1} parent=1 // pred_fallthru
      _
    // Predicated region
    $region14: #{tpu_custom_call.1} parent=1 // pred_check
      _
    $region15: #{tpu_custom_call.1} parent=1 // pred_check_branch
      %30 = sbr.rel (0) target = $region17
    $region16: #{tpu_custom_call.1} parent=1 // pred_region
      _
    $region17: #{tpu_custom_call.1} parent=1 // pred_fallthru
      _
    // Predicated region
    $region18: #{tpu_custom_call.1} parent=1 // pred_check
      _
    $region19: #{tpu_custom_call.1} parent=1 // pred_check_branch
      %32 = sbr.rel (0) target = $region21
    $region20: #{tpu_custom_call.1} parent=1 // pred_region
      _
    $region21: #{tpu_custom_call.1} parent=1 // pred_fallthru
      _
    // Predicated region
    $region22: #{tpu_custom_call.1} parent=1 // pred_check
      _
    $region23: #{tpu_custom_call.1} parent=1 // pred_check_branch
      %34 = sbr.rel (0) target = $region25
    $region24: #{tpu_custom_call.1} parent=1 // pred_region
      _
    $region25: #{tpu_custom_call.1} parent=1 // pred_fallthru
      _
    // Predicated region
    $region26: #{tpu_custom_call.1} parent=1 // pred_check
      _
    $region27: #{tpu_custom_call.1} parent=1 // pred_check_branch
      %36 = sbr.rel (0) target = $region29
    $region28: #{tpu_custom_call.1} parent=1 // pred_region
      _
    $region29: #{tpu_custom_call.1} parent=1 // pred_fallthru
      _
    // Predicated region
    $region30: #{tpu_custom_call.1} parent=1 // pred_check
      _
    $region31: #{tpu_custom_call.1} parent=1 // pred_check_branch
      %38 = sbr.rel (0) target = $region33
    $region32: #{tpu_custom_call.1} parent=1 // pred_region
      _
    $region33: #{tpu_custom_call.1} parent=1 // pred_fallthru
      _
    // Predicated region
    $region34: #{tpu_custom_call.1} parent=1 // pred_check
      _
    $region35: #{tpu_custom_call.1} parent=1 // pred_check_branch
      %40 = sbr.rel (0) target = $region37
    $region36: #{tpu_custom_call.1} parent=1 // pred_region
      _
    $region37: #{tpu_custom_call.1} parent=1 // pred_fallthru
      _
    // Predicated region
    $region38: #{tpu_custom_call.1} parent=1 // pred_check
      _
    $region39: #{tpu_custom_call.1} parent=1 // pred_check_branch
      %42 = sbr.rel (0) target = $region41
    $region40: #{tpu_custom_call.1} parent=1 // pred_region
      _
    $region41: #{tpu_custom_call.1} parent=1 // pred_fallthru
      _
    // Predicated region
    $region42: #{tpu_custom_call.1} parent=1 // pred_check
      _
    $region43: #{tpu_custom_call.1} parent=1 // pred_check_branch
      %44 = sbr.rel (0) target = $region45
    $region44: #{tpu_custom_call.1} parent=1 // pred_region
      _
    $region45: #{tpu_custom_call.1} parent=1 // pred_fallthru
      _
    // Predicated region
    $region46: #{tpu_custom_call.1} parent=1 // pred_check
      _
    $region47: #{tpu_custom_call.1} parent=1 // pred_check_branch
      %46 = sbr.rel (0) target = $region49
    $region48: #{tpu_custom_call.1} parent=1 // pred_region
      _
    $region49: #{tpu_custom_call.1} parent=1 // pred_fallthru
      _
    // Predicated region
    $region50: #{tpu_custom_call.1} parent=1 // pred_check
      _
    $region51: #{tpu_custom_call.1} parent=1 // pred_check_branch
      %48 = sbr.rel (0) target = $region53
    $region52: #{tpu_custom_call.1} parent=1 // pred_region
      _
    $region53: #{tpu_custom_call.1} parent=1 // pred_fallthru
      _
    // Predicated region
    $region54: #{tpu_custom_call.1} parent=1 // pred_check
      _
    $region55: #{tpu_custom_call.1} parent=1 // pred_check_branch
      %50 = sbr.rel (0) target = $region57
    $region56: #{tpu_custom_call.1} parent=1 // pred_region
      _
    $region57: #{tpu_custom_call.1} parent=1 // pred_fallthru
      _
    // Predicated region
    $region58: #{tpu_custom_call.1} parent=1 // pred_check
      _
    $region59: #{tpu_custom_call.1} parent=1 // pred_check_branch
      %52 = sbr.rel (0) target = $region61
    $region60: #{tpu_custom_call.1} parent=1 // pred_region
      _
    $region61: #{tpu_custom_call.1} parent=1 // pred_fallthru
      _
    // Predicated region
    $region62: #{tpu_custom_call.1} parent=1 // pred_check
      _
    $region63: #{tpu_custom_call.1} parent=1 // pred_check_branch
      %54 = sbr.rel (0) target = $region65
    $region64: #{tpu_custom_call.1} parent=1 // pred_region
      _
    $region65: #{tpu_custom_call.1} parent=1 // pred_fallthru
      _
    // Predicated region
    $region66: #{tpu_custom_call.1} parent=1 // pred_check
      _
    $region67: #{tpu_custom_call.1} parent=1 // pred_check_branch
      %56 = sbr.rel (0) target = $region69
    $region68: #{tpu_custom_call.1} parent=1 // pred_region
      _
    $region69: #{tpu_custom_call.1} parent=1 // pred_fallthru
      _
    %v57 = vld [vmem:[%s0] sm:$0xff]
    %v58 = vld [vmem:[%s1] sm:$0xff]
    %v59 = vld [vmem:[%s1 + $0x8] sm:$0xff]
    %v60 = vld [vmem:[%s1 + $0x10] sm:$0xff]
    %v61 = vld [vmem:[%s1 + $0x18] sm:$0x3f]
    %v62 = vld [vmem:[%s2] sm:$0xff]
    %v63 = vld [vmem:[%s2 + $0x8] sm:$0xff]
    %v64 = vld [vmem:[%s2 + $0x10] sm:$0xff]
    %v65 = vld [vmem:[%s2 + $0x18] sm:$0x3f]
    %v66 = vld [vmem:[%s3] sm:$0xff]
    %v67 = vld [vmem:[%s3 + $0x8] sm:$0xff]
    %v68 = vld [vmem:[%s3 + $0x10] sm:$0xff]
    %v69 = vld [vmem:[%s3 + $0x18] sm:$0x3f]
    %v70 = vld [vmem:[%s4] sm:$0xff]
    %v71 = vld [vmem:[%s4 + $0x8] sm:$0xff]
    %v72 = vld [vmem:[%s4 + $0x10] sm:$0xff]
    %v73 = vld [vmem:[%s4 + $0x18] sm:$0x3f]
    %v74 = vld [vmem:[%s5] sm:$0x7]
    %v75 = vld [vmem:[%s6] sm:$0x7]
    %v76 = vld [vmem:[%s7] sm:$0xf]
    %v77 = vld [vmem:[%s8] sm:$0xf]
    %79 = vset.pattern.permute.xlu0 0
    %80 = vperm.xlu0 %79, %v62
    %v81 = vpop.permute.xlu0 %80
    %84 = vset.pattern.permute.xlu0 0
    %85 = vperm.xlu0 %84, %v63
    %v86 = vpop.permute.xlu0 %85
    %89 = vset.pattern.permute.xlu0 0
    %90 = vperm.xlu0 %89, %v64
    %v91 = vpop.permute.xlu0 %90
    %94 = vset.pattern.permute.xlu0 0
    %95 = vperm.xlu0 %94, %v65
    %v96 = vpop.permute.xlu0 %95
    %vm98 = vcmask 31744
    %v100 = vsel %vm98, %v58, 0
    %v103 = vsel %vm98, %v59, 0
    %v106 = vsel %vm98, %v60, 0
    %v109 = vsel %vm98, %v61, 0
    %vm111 = vcmask 1043456
    %v113 = vsel %vm111, %v57, 0
    %115 = vmatprep.subr.mxu0 0.0
    %116 = vmatpush1.msra.mxu0 0.0
    %117 = vmatprep.subr.mxu0 0.0
    %118 = vmatpush1.msra.mxu0 0.0
    %119 = vmatprep.subr.mxu0 0.0
    %120 = vmatpush1.msra.mxu0 0.0
    %121 = vmatprep.subr.mxu0 0.0
    %122 = vmatpush1.msra.mxu0 0.0
    %123 = vmatprep.subr.mxu0 0.0
    %124 = vmatpush1.msra.mxu0 0.0
    %125 = vmatprep.subr.mxu0 0.0
    %126 = vmatpush1.msra.mxu0 0.0
    %127 = vmatprep.subr.mxu0 0.0
    %128 = vmatpush1.msra.mxu0 0.0
    %129 = vmatprep.subr.mxu0 0.0
    %130 = vmatpush1.msra.mxu0 0.0
    %131 = vmatprep.subr.mxu0 0.0
    %132 = vmatpush1.msra.mxu0 0.0
    %133 = vmatprep.subr.mxu0 0.0
    %134 = vmatpush1.msra.mxu0 0.0
    %135 = vmatprep.subr.mxu0 0.0
    %136 = vmatpush1.msra.mxu0 0.0
    %137 = vmatprep.subr.mxu0 0.0
    %138 = vmatpush1.msra.mxu0 0.0
    %139 = vmatprep.subr.mxu0 0.0
    %140 = vmatpush1.msra.mxu0 0.0
    %141 = vmatprep.subr.mxu0 0.0
    %142 = vmatpush1.msra.mxu0 0.0
    %143 = vmatprep.subr.mxu0 0.0
    %144 = vmatpush1.msra.mxu0 0.0
    %145 = vmatprep.subr.mxu0 0.0
    %146 = vmatpush1.msra.mxu0 %v113
    %147 = vmatprep.subr.mxu0 0.0
    %148 = vmatpush2.msra.mxu0 0.0
    %149 = vmatprep.subr.mxu0 0.0
    %150 = vmatpush2.msra.mxu0 0.0
    %151 = vmatprep.subr.mxu0 0.0
    %152 = vmatpush2.msra.mxu0 0.0
    %153 = vmatprep.subr.mxu0 0.0
    %154 = vmatpush2.msra.mxu0 0.0
    %155 = vmatprep.subr.mxu0 0.0
    %156 = vmatpush2.msra.mxu0 0.0
    %157 = vmatprep.subr.mxu0 0.0
    %158 = vmatpush2.msra.mxu0 0.0
    %159 = vmatprep.subr.mxu0 0.0
    %160 = vmatpush2.msra.mxu0 0.0
    %161 = vmatprep.subr.mxu0 0.0
    %162 = vmatpush2.msra.mxu0 0.0
    %163 = vmatprep.subr.mxu0 0.0
    %164 = vmatpush2.msra.mxu0 0.0
    %165 = vmatprep.subr.mxu0 0.0
    %166 = vmatpush2.msra.mxu0 0.0
    %167 = vmatprep.subr.mxu0 0.0
    %168 = vmatpush2.msra.mxu0 0.0
    %169 = vmatprep.subr.mxu0 0.0
    %170 = vmatpush2.msra.mxu0 0.0
    %171 = vmatprep.subr.mxu0 0.0
    %172 = vmatpush2.msra.mxu0 0.0
    %173 = vmatprep.subr.mxu0 0.0
    %174 = vmatpush2.msra.mxu0 0.0
    %175 = vmatprep.subr.mxu0 0.0
    %176 = vmatpush2.msra.mxu0 0.0
    %177 = vmatprep.subr.mxu0 0.0
    %178 = vmatpush2.msra.mxu0 0.0
    %179 = vmatprep.mubr.f32.mxu0 0.0
    %180 = vmatmul.mubr.f32.gmra.mxu0 %v100
    %v181 = vpop.f32.mrf.mxu0
    %v182 = vadd.f32 %v81, %v181
    %v183 = vpop.f32.mrf.mxu0
    %184 = vmatprep.mubr.f32.mxu0 0.0
    %185 = vmatmul.mubr.f32.gmra.mxu0 %v103
    %v186 = vpop.f32.mrf.mxu0
    %v187 = vadd.f32 %v86, %v186
    %v188 = vpop.f32.mrf.mxu0
    %189 = vmatprep.mubr.f32.mxu0 0.0
    %190 = vmatmul.mubr.f32.gmra.mxu0 %v106
    %v191 = vpop.f32.mrf.mxu0
    %v192 = vadd.f32 %v91, %v191
    %v193 = vpop.f32.mrf.mxu0
    %194 = vmatprep.mubr.f32.mxu0 0.0
    %195 = vmatmul.mubr.f32.gmra.mxu0 %v109
    %v196 = vpop.f32.mrf.mxu0
    %v197 = vadd.f32 %v96, %v196
    %v198 = vpop.f32.mrf.mxu0
    %199 = vdwg.mxu0
    %v200 = vmax.f32 %v182, 0.0
    %v201 = vmax.f32 %v187, 0.0
    %v202 = vmax.f32 %v192, 0.0
    %v203 = vmax.f32 %v197, 0.0
    %205 = vset.pattern.permute.xlu0 0
    %206 = vperm.xlu0 %205, %v70
    %v207 = vpop.permute.xlu0 %206
    %210 = vset.pattern.permute.xlu0 0
    %211 = vperm.xlu0 %210, %v71
    %v212 = vpop.permute.xlu0 %211
    %215 = vset.pattern.permute.xlu0 0
    %216 = vperm.xlu0 %215, %v72
    %v217 = vpop.permute.xlu0 %216
    %220 = vset.pattern.permute.xlu0 0
    %221 = vperm.xlu0 %220, %v73
    %v222 = vpop.permute.xlu0 %221
    %vm224 = vcmask 244736
    %v226 = vsel %vm224, %v66, 0
    %v229 = vsel %vm224, %v67, 0
    %v232 = vsel %vm224, %v68, 0
    %v235 = vsel %vm224, %v69, 0
    %vm237 = vcmask 1045504
    %v239 = vsel %vm237, %v203, 0
    %241 = vmatprep.subr.mxu0 0.0
    %242 = vmatpush1.msra.mxu0 0.0
    %243 = vmatprep.subr.mxu0 0.0
    %244 = vmatpush1.msra.mxu0 0.0
    %245 = vmatprep.subr.mxu0 0.0
    %246 = vmatpush1.msra.mxu0 0.0
    %247 = vmatprep.subr.mxu0 0.0
    %248 = vmatpush1.msra.mxu0 0.0
    %249 = vmatprep.subr.mxu0 0.0
    %250 = vmatpush1.msra.mxu0 0.0
    %251 = vmatprep.subr.mxu0 0.0
    %252 = vmatpush1.msra.mxu0 0.0
    %253 = vmatprep.subr.mxu0 0.0
    %254 = vmatpush1.msra.mxu0 0.0
    %255 = vmatprep.subr.mxu0 0.0
    %256 = vmatpush1.msra.mxu0 0.0
    %257 = vmatprep.subr.mxu0 0.0
    %258 = vmatpush1.msra.mxu0 0.0
    %259 = vmatprep.subr.mxu0 0.0
    %260 = vmatpush1.msra.mxu0 0.0
    %261 = vmatprep.subr.mxu0 0.0
    %262 = vmatpush1.msra.mxu0 0.0
    %263 = vmatprep.subr.mxu0 0.0
    %264 = vmatpush1.msra.mxu0 0.0
    %265 = vmatprep.subr.mxu0 0.0
    %266 = vmatpush1.msra.mxu0 %v239
    %267 = vmatprep.subr.mxu0 0.0
    %268 = vmatpush1.msra.mxu0 %v202
    %269 = vmatprep.subr.mxu0 0.0
    %270 = vmatpush1.msra.mxu0 %v201
    %271 = vmatprep.subr.mxu0 0.0
    %272 = vmatpush1.msra.mxu0 %v200
    %273 = vmatprep.subr.mxu0 0.0
    %274 = vmatpush2.msra.mxu0 0.0
    %275 = vmatprep.subr.mxu0 0.0
    %276 = vmatpush2.msra.mxu0 0.0
    %277 = vmatprep.subr.mxu0 0.0
    %278 = vmatpush2.msra.mxu0 0.0
    %279 = vmatprep.subr.mxu0 0.0
    %280 = vmatpush2.msra.mxu0 0.0
    %281 = vmatprep.subr.mxu0 0.0
    %282 = vmatpush2.msra.mxu0 0.0
    %283 = vmatprep.subr.mxu0 0.0
    %284 = vmatpush2.msra.mxu0 0.0
    %285 = vmatprep.subr.mxu0 0.0
    %286 = vmatpush2.msra.mxu0 0.0
    %287 = vmatprep.subr.mxu0 0.0
    %288 = vmatpush2.msra.mxu0 0.0
    %289 = vmatprep.subr.mxu0 0.0
    %290 = vmatpush2.msra.mxu0 0.0
    %291 = vmatprep.subr.mxu0 0.0
    %292 = vmatpush2.msra.mxu0 0.0
    %293 = vmatprep.subr.mxu0 0.0
    %294 = vmatpush2.msra.mxu0 0.0
    %295 = vmatprep.subr.mxu0 0.0
    %296 = vmatpush2.msra.mxu0 0.0
    %297 = vmatprep.subr.mxu0 0.0
    %298 = vmatpush2.msra.mxu0 0.0
    %299 = vmatprep.subr.mxu0 0.0
    %300 = vmatpush2.msra.mxu0 0.0
    %301 = vmatprep.subr.mxu0 0.0
    %302 = vmatpush2.msra.mxu0 0.0
    %303 = vmatprep.subr.mxu0 0.0
    %304 = vmatpush2.msra.mxu0 0.0
    %305 = vmatprep.mubr.f32.mxu0 0.0
    %306 = vmatmul.mubr.f32.gmra.mxu0 %v226
    %v307 = vpop.f32.mrf.mxu0
    %v308 = vadd.f32 %v207, %v307
    %v309 = vpop.f32.mrf.mxu0
    %310 = vmatprep.mubr.f32.mxu0 0.0
    %311 = vmatmul.mubr.f32.gmra.mxu0 %v229
    %v312 = vpop.f32.mrf.mxu0
    %v313 = vadd.f32 %v212, %v312
    %v314 = vpop.f32.mrf.mxu0
    %315 = vmatprep.mubr.f32.mxu0 0.0
    %316 = vmatmul.mubr.f32.gmra.mxu0 %v232
    %v317 = vpop.f32.mrf.mxu0
    %v318 = vadd.f32 %v217, %v317
    %v319 = vpop.f32.mrf.mxu0
    %320 = vmatprep.mubr.f32.mxu0 0.0
    %321 = vmatmul.mubr.f32.gmra.mxu0 %v235
    %v322 = vpop.f32.mrf.mxu0
    %v323 = vadd.f32 %v222, %v322
    %v324 = vpop.f32.mrf.mxu0
    %325 = vdwg.mxu0
    %v326 = vmax.f32 %v308, 0.0
    %v327 = vmax.f32 %v313, 0.0
    %v328 = vmax.f32 %v318, 0.0
    %v329 = vmax.f32 %v323, 0.0
    %331 = vset.pattern.permute.xlu0 0
    %332 = vperm.xlu0 %331, %v75
    %v333 = vpop.permute.xlu0 %332
    %v336 = vsel %vm224, %v74, 0
    %v339 = vsel %vm237, %v329, 0
    %341 = vmatprep.subr.mxu0 0.0
    %342 = vmatpush1.msra.mxu0 0.0
    %343 = vmatprep.subr.mxu0 0.0
    %344 = vmatpush1.msra.mxu0 0.0
    %345 = vmatprep.subr.mxu0 0.0
    %346 = vmatpush1.msra.mxu0 0.0
    %347 = vmatprep.subr.mxu0 0.0
    %348 = vmatpush1.msra.mxu0 0.0
    %349 = vmatprep.subr.mxu0 0.0
    %350 = vmatpush1.msra.mxu0 0.0
    %351 = vmatprep.subr.mxu0 0.0
    %352 = vmatpush1.msra.mxu0 0.0
    %353 = vmatprep.subr.mxu0 0.0
    %354 = vmatpush1.msra.mxu0 0.0
    %355 = vmatprep.subr.mxu0 0.0
    %356 = vmatpush1.msra.mxu0 0.0
    %357 = vmatprep.subr.mxu0 0.0
    %358 = vmatpush1.msra.mxu0 0.0
    %359 = vmatprep.subr.mxu0 0.0
    %360 = vmatpush1.msra.mxu0 0.0
    %361 = vmatprep.subr.mxu0 0.0
    %362 = vmatpush1.msra.mxu0 0.0
    %363 = vmatprep.subr.mxu0 0.0
    %364 = vmatpush1.msra.mxu0 0.0
    %365 = vmatprep.subr.mxu0 0.0
    %366 = vmatpush1.msra.mxu0 %v339
    %367 = vmatprep.subr.mxu0 0.0
    %368 = vmatpush1.msra.mxu0 %v328
    %369 = vmatprep.subr.mxu0 0.0
    %370 = vmatpush1.msra.mxu0 %v327
    %371 = vmatprep.subr.mxu0 0.0
    %372 = vmatpush1.msra.mxu0 %v326
    %373 = vmatprep.subr.mxu0 0.0
    %374 = vmatpush2.msra.mxu0 0.0
    %375 = vmatprep.subr.mxu0 0.0
    %376 = vmatpush2.msra.mxu0 0.0
    %377 = vmatprep.subr.mxu0 0.0
    %378 = vmatpush2.msra.mxu0 0.0
    %379 = vmatprep.subr.mxu0 0.0
    %380 = vmatpush2.msra.mxu0 0.0
    %381 = vmatprep.subr.mxu0 0.0
    %382 = vmatpush2.msra.mxu0 0.0
    %383 = vmatprep.subr.mxu0 0.0
    %384 = vmatpush2.msra.mxu0 0.0
    %385 = vmatprep.subr.mxu0 0.0
    %386 = vmatpush2.msra.mxu0 0.0
    %387 = vmatprep.subr.mxu0 0.0
    %388 = vmatpush2.msra.mxu0 0.0
    %389 = vmatprep.subr.mxu0 0.0
    %390 = vmatpush2.msra.mxu0 0.0
    %391 = vmatprep.subr.mxu0 0.0
    %392 = vmatpush2.msra.mxu0 0.0
    %393 = vmatprep.subr.mxu0 0.0
    %394 = vmatpush2.msra.mxu0 0.0
    %395 = vmatprep.subr.mxu0 0.0
    %396 = vmatpush2.msra.mxu0 0.0
    %397 = vmatprep.subr.mxu0 0.0
    %398 = vmatpush2.msra.mxu0 0.0
    %399 = vmatprep.subr.mxu0 0.0
    %400 = vmatpush2.msra.mxu0 0.0
    %401 = vmatprep.subr.mxu0 0.0
    %402 = vmatpush2.msra.mxu0 0.0
    %403 = vmatprep.subr.mxu0 0.0
    %404 = vmatpush2.msra.mxu0 0.0
    %405 = vmatprep.mubr.f32.mxu0 0.0
    %406 = vmatmul.mubr.f32.gmra.mxu0 %v336
    %v407 = vpop.f32.mrf.mxu0
    %v408 = vadd.f32 %v333, %v407
    %v409 = vpop.f32.mrf.mxu0
    %410 = vdwg.mxu0
    %v411 = vtanh.pop %v408
    %v412 = vmul.f32 %v411, 0.1
    %414 = vset.pattern.permute.xlu0 0
    %415 = vperm.xlu0 %414, %v77
    %v416 = vpop.permute.xlu0 %415
    %v419 = vsel %vm224, %v76, 0
    %421 = vmatprep.subr.mxu0 0.0
    %422 = vmatpush1.msra.mxu0 0.0
    %423 = vmatprep.subr.mxu0 0.0
    %424 = vmatpush1.msra.mxu0 0.0
    %425 = vmatprep.subr.mxu0 0.0
    %426 = vmatpush1.msra.mxu0 0.0
    %427 = vmatprep.subr.mxu0 0.0
    %428 = vmatpush1.msra.mxu0 0.0
    %429 = vmatprep.subr.mxu0 0.0
    %430 = vmatpush1.msra.mxu0 0.0
    %431 = vmatprep.subr.mxu0 0.0
    %432 = vmatpush1.msra.mxu0 0.0
    %433 = vmatprep.subr.mxu0 0.0
    %434 = vmatpush1.msra.mxu0 0.0
    %435 = vmatprep.subr.mxu0 0.0
    %436 = vmatpush1.msra.mxu0 0.0
    %437 = vmatprep.subr.mxu0 0.0
    %438 = vmatpush1.msra.mxu0 0.0
    %439 = vmatprep.subr.mxu0 0.0
    %440 = vmatpush1.msra.mxu0 0.0
    %441 = vmatprep.subr.mxu0 0.0
    %442 = vmatpush1.msra.mxu0 0.0
    %443 = vmatprep.subr.mxu0 0.0
    %444 = vmatpush1.msra.mxu0 0.0
    %445 = vmatprep.subr.mxu0 0.0
    %446 = vmatpush1.msra.mxu0 %v339
    %447 = vmatprep.subr.mxu0 0.0
    %448 = vmatpush1.msra.mxu0 %v328
    %449 = vmatprep.subr.mxu0 0.0
    %450 = vmatpush1.msra.mxu0 %v327
    %451 = vmatprep.subr.mxu0 0.0
    %452 = vmatpush1.msra.mxu0 %v326
    %453 = vmatprep.subr.mxu0 0.0
    %454 = vmatpush2.msra.mxu0 0.0
    %455 = vmatprep.subr.mxu0 0.0
    %456 = vmatpush2.msra.mxu0 0.0
    %457 = vmatprep.subr.mxu0 0.0
    %458 = vmatpush2.msra.mxu0 0.0
    %459 = vmatprep.subr.mxu0 0.0
    %460 = vmatpush2.msra.mxu0 0.0
    %461 = vmatprep.subr.mxu0 0.0
    %462 = vmatpush2.msra.mxu0 0.0
    %463 = vmatprep.subr.mxu0 0.0
    %464 = vmatpush2.msra.mxu0 0.0
    %465 = vmatprep.subr.mxu0 0.0
    %466 = vmatpush2.msra.mxu0 0.0
    %467 = vmatprep.subr.mxu0 0.0
    %468 = vmatpush2.msra.mxu0 0.0
    %469 = vmatprep.subr.mxu0 0.0
    %470 = vmatpush2.msra.mxu0 0.0
    %471 = vmatprep.subr.mxu0 0.0
    %472 = vmatpush2.msra.mxu0 0.0
    %473 = vmatprep.subr.mxu0 0.0
    %474 = vmatpush2.msra.mxu0 0.0
    %475 = vmatprep.subr.mxu0 0.0
    %476 = vmatpush2.msra.mxu0 0.0
    %477 = vmatprep.subr.mxu0 0.0
    %478 = vmatpush2.msra.mxu0 0.0
    %479 = vmatprep.subr.mxu0 0.0
    %480 = vmatpush2.msra.mxu0 0.0
    %481 = vmatprep.subr.mxu0 0.0
    %482 = vmatpush2.msra.mxu0 0.0
    %483 = vmatprep.subr.mxu0 0.0
    %484 = vmatpush2.msra.mxu0 0.0
    %485 = vmatprep.mubr.f32.mxu0 0.0
    %486 = vmatmul.mubr.f32.gmra.mxu0 %v419
    %v487 = vpop.f32.mrf.mxu0
    %v488 = vadd.f32 %v416, %v487
    %v489 = vpop.f32.mrf.mxu0
    %490 = vdwg.mxu0
    %vm491 = vcmask 1042432
    %v492 = vsel %vm491, %v412, 0.0
    %v493 = vrot.slane %v492, 4
    %v494 = vadd.f32 %v492, %v493
    %v495 = vrot.slane %v494, 2
    %v496 = vadd.f32 %v494, %v495
    %v497 = vrot.slane %v496, 1
    %v498 = vadd.f32 %v496, %v497
    %v499 = vsub.f32 0.0, %v498
    %v500 = vsel %vm491, %v412, %v499
    %v501 = vmul.f32 %v500, 1.442695
    %v502 = vpow.pop %v501
    %v504 = vrot.slane %v502, 4
    %v506 = vmul.f32 %v57, %v504
    %v508 = vrot.slane %v488, 4
    %v510 = vadd.f32 %v506, %v508
    %v511 = vld [vmem:[%s9] sm:$0xff]
    %v512 = vld [vmem:[%s9 + $0x8] sm:$0xff]
    %v513 = vld [vmem:[%s9 + $0x10] sm:$0xff]
    %v514 = vld [vmem:[%s9 + $0x18] sm:$0x3f]
    %v515 = vld [vmem:[%s10] sm:$0xff]
    %v516 = vld [vmem:[%s10 + $0x8] sm:$0xff]
    %v517 = vld [vmem:[%s10 + $0x10] sm:$0xff]
    %v518 = vld [vmem:[%s10 + $0x18] sm:$0x3f]
    %v519 = vld [vmem:[%s11] sm:$0xff]
    %v520 = vld [vmem:[%s11 + $0x8] sm:$0xff]
    %v521 = vld [vmem:[%s11 + $0x10] sm:$0xff]
    %v522 = vld [vmem:[%s11 + $0x18] sm:$0x3f]
    %v523 = vld [vmem:[%s12] sm:$0xff]
    %v524 = vld [vmem:[%s12 + $0x8] sm:$0xff]
    %v525 = vld [vmem:[%s12 + $0x10] sm:$0xff]
    %v526 = vld [vmem:[%s12 + $0x18] sm:$0x3f]
    %v527 = vld [vmem:[%s13] sm:$0x7]
    %v528 = vld [vmem:[%s14] sm:$0x7]
    %v529 = vld [vmem:[%s15] sm:$0xf]
    %v530 = vld [vmem:[%s16] sm:$0xf]
    %532 = vset.pattern.permute.xlu0 0
    %533 = vperm.xlu0 %532, %v515
    %v534 = vpop.permute.xlu0 %533
    %537 = vset.pattern.permute.xlu0 0
    %538 = vperm.xlu0 %537, %v516
    %v539 = vpop.permute.xlu0 %538
    %542 = vset.pattern.permute.xlu0 0
    %543 = vperm.xlu0 %542, %v517
    %v544 = vpop.permute.xlu0 %543
    %547 = vset.pattern.permute.xlu0 0
    %548 = vperm.xlu0 %547, %v518
    %v549 = vpop.permute.xlu0 %548
    %v552 = vrot.slane %v510, 4
    %v554 = vsel %vm98, %v511, 0
    %v557 = vsel %vm98, %v512, 0
    %v560 = vsel %vm98, %v513, 0
    %v563 = vsel %vm98, %v514, 0
    %v565 = vsel %vm111, %v552, 0
    %567 = vmatprep.subr.mxu0 0.0
    %568 = vmatpush1.msra.mxu0 0.0
    %569 = vmatprep.subr.mxu0 0.0
    %570 = vmatpush1.msra.mxu0 0.0
    %571 = vmatprep.subr.mxu0 0.0
    %572 = vmatpush1.msra.mxu0 0.0
    %573 = vmatprep.subr.mxu0 0.0
    %574 = vmatpush1.msra.mxu0 0.0
    %575 = vmatprep.subr.mxu0 0.0
    %576 = vmatpush1.msra.mxu0 0.0
    %577 = vmatprep.subr.mxu0 0.0
    %578 = vmatpush1.msra.mxu0 0.0
    %579 = vmatprep.subr.mxu0 0.0
    %580 = vmatpush1.msra.mxu0 0.0
    %581 = vmatprep.subr.mxu0 0.0
    %582 = vmatpush1.msra.mxu0 0.0
    %583 = vmatprep.subr.mxu0 0.0
    %584 = vmatpush1.msra.mxu0 0.0
    %585 = vmatprep.subr.mxu0 0.0
    %586 = vmatpush1.msra.mxu0 0.0
    %587 = vmatprep.subr.mxu0 0.0
    %588 = vmatpush1.msra.mxu0 0.0
    %589 = vmatprep.subr.mxu0 0.0
    %590 = vmatpush1.msra.mxu0 0.0
    %591 = vmatprep.subr.mxu0 0.0
    %592 = vmatpush1.msra.mxu0 0.0
    %593 = vmatprep.subr.mxu0 0.0
    %594 = vmatpush1.msra.mxu0 0.0
    %595 = vmatprep.subr.mxu0 0.0
    %596 = vmatpush1.msra.mxu0 0.0
    %597 = vmatprep.subr.mxu0 0.0
    %598 = vmatpush1.msra.mxu0 %v565
    %599 = vmatprep.subr.mxu0 0.0
    %600 = vmatpush2.msra.mxu0 0.0
    %601 = vmatprep.subr.mxu0 0.0
    %602 = vmatpush2.msra.mxu0 0.0
    %603 = vmatprep.subr.mxu0 0.0
    %604 = vmatpush2.msra.mxu0 0.0
    %605 = vmatprep.subr.mxu0 0.0
    %606 = vmatpush2.msra.mxu0 0.0
    %607 = vmatprep.subr.mxu0 0.0
    %608 = vmatpush2.msra.mxu0 0.0
    %609 = vmatprep.subr.mxu0 0.0
    %610 = vmatpush2.msra.mxu0 0.0
    %611 = vmatprep.subr.mxu0 0.0
    %612 = vmatpush2.msra.mxu0 0.0
    %613 = vmatprep.subr.mxu0 0.0
    %614 = vmatpush2.msra.mxu0 0.0
    %615 = vmatprep.subr.mxu0 0.0
    %616 = vmatpush2.msra.mxu0 0.0
    %617 = vmatprep.subr.mxu0 0.0
    %618 = vmatpush2.msra.mxu0 0.0
    %619 = vmatprep.subr.mxu0 0.0
    %620 = vmatpush2.msra.mxu0 0.0
    %621 = vmatprep.subr.mxu0 0.0
    %622 = vmatpush2.msra.mxu0 0.0
    %623 = vmatprep.subr.mxu0 0.0
    %624 = vmatpush2.msra.mxu0 0.0
    %625 = vmatprep.subr.mxu0 0.0
    %626 = vmatpush2.msra.mxu0 0.0
    %627 = vmatprep.subr.mxu0 0.0
    %628 = vmatpush2.msra.mxu0 0.0
    %629 = vmatprep.subr.mxu0 0.0
    %630 = vmatpush2.msra.mxu0 0.0
    %631 = vmatprep.mubr.f32.mxu0 0.0
    %632 = vmatmul.mubr.f32.gmra.mxu0 %v554
    %v633 = vpop.f32.mrf.mxu0
    %v634 = vadd.f32 %v534, %v633
    %v635 = vpop.f32.mrf.mxu0
    %636 = vmatprep.mubr.f32.mxu0 0.0
    %637 = vmatmul.mubr.f32.gmra.mxu0 %v557
    %v638 = vpop.f32.mrf.mxu0
    %v639 = vadd.f32 %v539, %v638
    %v640 = vpop.f32.mrf.mxu0
    %641 = vmatprep.mubr.f32.mxu0 0.0
    %642 = vmatmul.mubr.f32.gmra.mxu0 %v560
    %v643 = vpop.f32.mrf.mxu0
    %v644 = vadd.f32 %v544, %v643
    %v645 = vpop.f32.mrf.mxu0
    %646 = vmatprep.mubr.f32.mxu0 0.0
    %647 = vmatmul.mubr.f32.gmra.mxu0 %v563
    %v648 = vpop.f32.mrf.mxu0
    %v649 = vadd.f32 %v549, %v648
    %v650 = vpop.f32.mrf.mxu0
    %651 = vdwg.mxu0
    %v652 = vmax.f32 %v634, 0.0
    %v653 = vmax.f32 %v639, 0.0
    %v654 = vmax.f32 %v644, 0.0
    %v655 = vmax.f32 %v649, 0.0
    %657 = vset.pattern.permute.xlu0 0
    %658 = vperm.xlu0 %657, %v523
    %v659 = vpop.permute.xlu0 %658
    %662 = vset.pattern.permute.xlu0 0
    %663 = vperm.xlu0 %662, %v524
    %v664 = vpop.permute.xlu0 %663
    %667 = vset.pattern.permute.xlu0 0
    %668 = vperm.xlu0 %667, %v525
    %v669 = vpop.permute.xlu0 %668
    %672 = vset.pattern.permute.xlu0 0
    %673 = vperm.xlu0 %672, %v526
    %v674 = vpop.permute.xlu0 %673
    %v677 = vsel %vm224, %v519, 0
    %v680 = vsel %vm224, %v520, 0
    %v683 = vsel %vm224, %v521, 0
    %v686 = vsel %vm224, %v522, 0
    %v689 = vsel %vm237, %v655, 0
    %691 = vmatprep.subr.mxu0 0.0
    %692 = vmatpush1.msra.mxu0 0.0
    %693 = vmatprep.subr.mxu0 0.0
    %694 = vmatpush1.msra.mxu0 0.0
    %695 = vmatprep.subr.mxu0 0.0
    %696 = vmatpush1.msra.mxu0 0.0
    %697 = vmatprep.subr.mxu0 0.0
    %698 = vmatpush1.msra.mxu0 0.0
    %699 = vmatprep.subr.mxu0 0.0
    %700 = vmatpush1.msra.mxu0 0.0
    %701 = vmatprep.subr.mxu0 0.0
    %702 = vmatpush1.msra.mxu0 0.0
    %703 = vmatprep.subr.mxu0 0.0
    %704 = vmatpush1.msra.mxu0 0.0
    %705 = vmatprep.subr.mxu0 0.0
    %706 = vmatpush1.msra.mxu0 0.0
    %707 = vmatprep.subr.mxu0 0.0
    %708 = vmatpush1.msra.mxu0 0.0
    %709 = vmatprep.subr.mxu0 0.0
    %710 = vmatpush1.msra.mxu0 0.0
    %711 = vmatprep.subr.mxu0 0.0
    %712 = vmatpush1.msra.mxu0 0.0
    %713 = vmatprep.subr.mxu0 0.0
    %714 = vmatpush1.msra.mxu0 0.0
    %715 = vmatprep.subr.mxu0 0.0
    %716 = vmatpush1.msra.mxu0 %v689
    %717 = vmatprep.subr.mxu0 0.0
    %718 = vmatpush1.msra.mxu0 %v654
    %719 = vmatprep.subr.mxu0 0.0
    %720 = vmatpush1.msra.mxu0 %v653
    %721 = vmatprep.subr.mxu0 0.0
    %722 = vmatpush1.msra.mxu0 %v652
    %723 = vmatprep.subr.mxu0 0.0
    %724 = vmatpush2.msra.mxu0 0.0
    %725 = vmatprep.subr.mxu0 0.0
    %726 = vmatpush2.msra.mxu0 0.0
    %727 = vmatprep.subr.mxu0 0.0
    %728 = vmatpush2.msra.mxu0 0.0
    %729 = vmatprep.subr.mxu0 0.0
    %730 = vmatpush2.msra.mxu0 0.0
    %731 = vmatprep.subr.mxu0 0.0
    %732 = vmatpush2.msra.mxu0 0.0
    %733 = vmatprep.subr.mxu0 0.0
    %734 = vmatpush2.msra.mxu0 0.0
    %735 = vmatprep.subr.mxu0 0.0
    %736 = vmatpush2.msra.mxu0 0.0
    %737 = vmatprep.subr.mxu0 0.0
    %738 = vmatpush2.msra.mxu0 0.0
    %739 = vmatprep.subr.mxu0 0.0
    %740 = vmatpush2.msra.mxu0 0.0
    %741 = vmatprep.subr.mxu0 0.0
    %742 = vmatpush2.msra.mxu0 0.0
    %743 = vmatprep.subr.mxu0 0.0
    %744 = vmatpush2.msra.mxu0 0.0
    %745 = vmatprep.subr.mxu0 0.0
    %746 = vmatpush2.msra.mxu0 0.0
    %747 = vmatprep.subr.mxu0 0.0
    %748 = vmatpush2.msra.mxu0 0.0
    %749 = vmatprep.subr.mxu0 0.0
    %750 = vmatpush2.msra.mxu0 0.0
    %751 = vmatprep.subr.mxu0 0.0
    %752 = vmatpush2.msra.mxu0 0.0
    %753 = vmatprep.subr.mxu0 0.0
    %754 = vmatpush2.msra.mxu0 0.0
    %755 = vmatprep.mubr.f32.mxu0 0.0
    %756 = vmatmul.mubr.f32.gmra.mxu0 %v677
    %v757 = vpop.f32.mrf.mxu0
    %v758 = vadd.f32 %v659, %v757
    %v759 = vpop.f32.mrf.mxu0
    %760 = vmatprep.mubr.f32.mxu0 0.0
    %761 = vmatmul.mubr.f32.gmra.mxu0 %v680
    %v762 = vpop.f32.mrf.mxu0
    %v763 = vadd.f32 %v664, %v762
    %v764 = vpop.f32.mrf.mxu0
    %765 = vmatprep.mubr.f32.mxu0 0.0
    %766 = vmatmul.mubr.f32.gmra.mxu0 %v683
    %v767 = vpop.f32.mrf.mxu0
    %v768 = vadd.f32 %v669, %v767
    %v769 = vpop.f32.mrf.mxu0
    %770 = vmatprep.mubr.f32.mxu0 0.0
    %771 = vmatmul.mubr.f32.gmra.mxu0 %v686
    %v772 = vpop.f32.mrf.mxu0
    %v773 = vadd.f32 %v674, %v772
    %v774 = vpop.f32.mrf.mxu0
    %775 = vdwg.mxu0
    %v776 = vmax.f32 %v758, 0.0
    %v777 = vmax.f32 %v763, 0.0
    %v778 = vmax.f32 %v768, 0.0
    %v779 = vmax.f32 %v773, 0.0
    %781 = vset.pattern.permute.xlu0 0
    %782 = vperm.xlu0 %781, %v528
    %v783 = vpop.permute.xlu0 %782
    %v786 = vsel %vm224, %v527, 0
    %v789 = vsel %vm237, %v779, 0
    %791 = vmatprep.subr.mxu0 0.0
    %792 = vmatpush1.msra.mxu0 0.0
    %793 = vmatprep.subr.mxu0 0.0
    %794 = vmatpush1.msra.mxu0 0.0
    %795 = vmatprep.subr.mxu0 0.0
    %796 = vmatpush1.msra.mxu0 0.0
    %797 = vmatprep.subr.mxu0 0.0
    %798 = vmatpush1.msra.mxu0 0.0
    %799 = vmatprep.subr.mxu0 0.0
    %800 = vmatpush1.msra.mxu0 0.0
    %801 = vmatprep.subr.mxu0 0.0
    %802 = vmatpush1.msra.mxu0 0.0
    %803 = vmatprep.subr.mxu0 0.0
    %804 = vmatpush1.msra.mxu0 0.0
    %805 = vmatprep.subr.mxu0 0.0
    %806 = vmatpush1.msra.mxu0 0.0
    %807 = vmatprep.subr.mxu0 0.0
    %808 = vmatpush1.msra.mxu0 0.0
    %809 = vmatprep.subr.mxu0 0.0
    %810 = vmatpush1.msra.mxu0 0.0
    %811 = vmatprep.subr.mxu0 0.0
    %812 = vmatpush1.msra.mxu0 0.0
    %813 = vmatprep.subr.mxu0 0.0
    %814 = vmatpush1.msra.mxu0 0.0
    %815 = vmatprep.subr.mxu0 0.0
    %816 = vmatpush1.msra.mxu0 %v789
    %817 = vmatprep.subr.mxu0 0.0
    %818 = vmatpush1.msra.mxu0 %v778
    %819 = vmatprep.subr.mxu0 0.0
    %820 = vmatpush1.msra.mxu0 %v777
    %821 = vmatprep.subr.mxu0 0.0
    %822 = vmatpush1.msra.mxu0 %v776
    %823 = vmatprep.subr.mxu0 0.0
    %824 = vmatpush2.msra.mxu0 0.0
    %825 = vmatprep.subr.mxu0 0.0
    %826 = vmatpush2.msra.mxu0 0.0
    %827 = vmatprep.subr.mxu0 0.0
    %828 = vmatpush2.msra.mxu0 0.0
    %829 = vmatprep.subr.mxu0 0.0
    %830 = vmatpush2.msra.mxu0 0.0
    %831 = vmatprep.subr.mxu0 0.0
    %832 = vmatpush2.msra.mxu0 0.0
    %833 = vmatprep.subr.mxu0 0.0
    %834 = vmatpush2.msra.mxu0 0.0
    %835 = vmatprep.subr.mxu0 0.0
    %836 = vmatpush2.msra.mxu0 0.0
    %837 = vmatprep.subr.mxu0 0.0
    %838 = vmatpush2.msra.mxu0 0.0
    %839 = vmatprep.subr.mxu0 0.0
    %840 = vmatpush2.msra.mxu0 0.0
    %841 = vmatprep.subr.mxu0 0.0
    %842 = vmatpush2.msra.mxu0 0.0
    %843 = vmatprep.subr.mxu0 0.0
    %844 = vmatpush2.msra.mxu0 0.0
    %845 = vmatprep.subr.mxu0 0.0
    %846 = vmatpush2.msra.mxu0 0.0
    %847 = vmatprep.subr.mxu0 0.0
    %848 = vmatpush2.msra.mxu0 0.0
    %849 = vmatprep.subr.mxu0 0.0
    %850 = vmatpush2.msra.mxu0 0.0
    %851 = vmatprep.subr.mxu0 0.0
    %852 = vmatpush2.msra.mxu0 0.0
    %853 = vmatprep.subr.mxu0 0.0
    %854 = vmatpush2.msra.mxu0 0.0
    %855 = vmatprep.mubr.f32.mxu0 0.0
    %856 = vmatmul.mubr.f32.gmra.mxu0 %v786
    %v857 = vpop.f32.mrf.mxu0
    %v858 = vadd.f32 %v783, %v857
    %v859 = vpop.f32.mrf.mxu0
    %860 = vdwg.mxu0
    %v861 = vtanh.pop %v858
    %v862 = vmul.f32 %v861, 0.1
    %864 = vset.pattern.permute.xlu0 0
    %865 = vperm.xlu0 %864, %v530
    %v866 = vpop.permute.xlu0 %865
    %v869 = vsel %vm224, %v529, 0
    %871 = vmatprep.subr.mxu0 0.0
    %872 = vmatpush1.msra.mxu0 0.0
    %873 = vmatprep.subr.mxu0 0.0
    %874 = vmatpush1.msra.mxu0 0.0
    %875 = vmatprep.subr.mxu0 0.0
    %876 = vmatpush1.msra.mxu0 0.0
    %877 = vmatprep.subr.mxu0 0.0
    %878 = vmatpush1.msra.mxu0 0.0
    %879 = vmatprep.subr.mxu0 0.0
    %880 = vmatpush1.msra.mxu0 0.0
    %881 = vmatprep.subr.mxu0 0.0
    %882 = vmatpush1.msra.mxu0 0.0
    %883 = vmatprep.subr.mxu0 0.0
    %884 = vmatpush1.msra.mxu0 0.0
    %885 = vmatprep.subr.mxu0 0.0
    %886 = vmatpush1.msra.mxu0 0.0
    %887 = vmatprep.subr.mxu0 0.0
    %888 = vmatpush1.msra.mxu0 0.0
    %889 = vmatprep.subr.mxu0 0.0
    %890 = vmatpush1.msra.mxu0 0.0
    %891 = vmatprep.subr.mxu0 0.0
    %892 = vmatpush1.msra.mxu0 0.0
    %893 = vmatprep.subr.mxu0 0.0
    %894 = vmatpush1.msra.mxu0 0.0
    %895 = vmatprep.subr.mxu0 0.0
    %896 = vmatpush1.msra.mxu0 %v789
    %897 = vmatprep.subr.mxu0 0.0
    %898 = vmatpush1.msra.mxu0 %v778
    %899 = vmatprep.subr.mxu0 0.0
    %900 = vmatpush1.msra.mxu0 %v777
    %901 = vmatprep.subr.mxu0 0.0
    %902 = vmatpush1.msra.mxu0 %v776
    %903 = vmatprep.subr.mxu0 0.0
    %904 = vmatpush2.msra.mxu0 0.0
    %905 = vmatprep.subr.mxu0 0.0
    %906 = vmatpush2.msra.mxu0 0.0
    %907 = vmatprep.subr.mxu0 0.0
    %908 = vmatpush2.msra.mxu0 0.0
    %909 = vmatprep.subr.mxu0 0.0
    %910 = vmatpush2.msra.mxu0 0.0
    %911 = vmatprep.subr.mxu0 0.0
    %912 = vmatpush2.msra.mxu0 0.0
    %913 = vmatprep.subr.mxu0 0.0
    %914 = vmatpush2.msra.mxu0 0.0
    %915 = vmatprep.subr.mxu0 0.0
    %916 = vmatpush2.msra.mxu0 0.0
    %917 = vmatprep.subr.mxu0 0.0
    %918 = vmatpush2.msra.mxu0 0.0
    %919 = vmatprep.subr.mxu0 0.0
    %920 = vmatpush2.msra.mxu0 0.0
    %921 = vmatprep.subr.mxu0 0.0
    %922 = vmatpush2.msra.mxu0 0.0
    %923 = vmatprep.subr.mxu0 0.0
    %924 = vmatpush2.msra.mxu0 0.0
    %925 = vmatprep.subr.mxu0 0.0
    %926 = vmatpush2.msra.mxu0 0.0
    %927 = vmatprep.subr.mxu0 0.0
    %928 = vmatpush2.msra.mxu0 0.0
    %929 = vmatprep.subr.mxu0 0.0
    %930 = vmatpush2.msra.mxu0 0.0
    %931 = vmatprep.subr.mxu0 0.0
    %932 = vmatpush2.msra.mxu0 0.0
    %933 = vmatprep.subr.mxu0 0.0
    %934 = vmatpush2.msra.mxu0 0.0
    %935 = vmatprep.mubr.f32.mxu0 0.0
    %936 = vmatmul.mubr.f32.gmra.mxu0 %v869
    %v937 = vpop.f32.mrf.mxu0
    %v938 = vadd.f32 %v866, %v937
    %v939 = vpop.f32.mrf.mxu0
    %940 = vdwg.mxu0
    %v941 = vsel %vm491, %v862, 0.0
    %v942 = vrot.slane %v941, 4
    %v943 = vadd.f32 %v941, %v942
    %v944 = vrot.slane %v943, 2
    %v945 = vadd.f32 %v943, %v944
    %v946 = vrot.slane %v945, 1
    %v947 = vadd.f32 %v945, %v946
    %v948 = vsub.f32 0.0, %v947
    %v949 = vsel %vm491, %v862, %v948
    %v950 = vmul.f32 %v949, 1.442695
    %v951 = vpow.pop %v950
    %v952 = vmul.f32 %v57, %v951
    %v953 = vadd.f32 %v952, %v938
    %954 = vst [vmem:[#allocation2] sm:$0xf] %v953
    %955 = vst [vmem:[#allocation2] sm:$0xf0] %v510
    // Predicated region
    $region70: #{tpu_custom_call.1} parent=1 // pred_check
      _
    $region71: #{tpu_custom_call.1} parent=1 // pred_check_branch
      %957 = sbr.rel (0) target = $region73
    $region72: #{tpu_custom_call.1} parent=1 // pred_region
      %s959 = ssub.s32 128, 128
      %960 = vsyncadd [#allocation3], %s959
      %s962 = sshll.u32 [#allocation2], 4
      %s963 = int_to_ptr.vmem [resolvable:$true] %s962
      %965 = dma.vmem_to_hbm [thread:$0]  %s963, 128, %s17, [#allocation3]
    $region73: #{tpu_custom_call.1} parent=1 // pred_fallthru
      _
    // Predicated region
    $region74: #{tpu_custom_call.1} parent=1 // pred_check
      _
    $region75: #{tpu_custom_call.1} parent=1 // pred_check_branch
      %967 = sbr.rel (0) target = $region77
    $region76: #{tpu_custom_call.1} parent=1 // pred_region
      %968 = dma.done [#allocation3], 128
    $region77: #{tpu_custom_call.1} parent=1 // pred_fallthru
      _
    %969 = vsyncpa [#allocation3], 1

</llo_original>
